<compile_context>
chip_gen: v5e
topology: v5e:2x2
jax: 0.10.0
libtpu: 0.0.40
codegen_flags: <defaults>
</compile_context>

<pallas_src>
import functools

import jax
import jax.numpy as jnp
import numpy as np
from jax import lax
from jax.experimental import pallas as pl
from jax.experimental.pallas import tpu as pltpu


def _basic_block_kernel(xd_ref, b1_ref, b2_ref, g1_ref, be1_ref, g2_ref,
                        be2_ref, out_ref, *, N, H, W, C, eps):
    NH = N * H
    WC = W * C
    inv_m = 1.0 / float(N * H * W)

    # (NH, 1) row-halo masks: dense row r is image row h = r % H.  Use a
    # bitwise AND when H is a power of two (no integer-divide-class VPU op).
    row = lax.broadcasted_iota(jnp.int32, (NH, 1), 0)
    h_idx = (row & (H - 1)) if (H & (H - 1)) == 0 else (row % H)
    has_above = h_idx != 0          # h-1 exists (also kills cross-image bleed)
    has_below = h_idx != (H - 1)    # h+1 exists

    def conv3x3(x, b_ref):
        # x: (NH, WC) lane-dense f32 image.
        # b_ref: (3*WC, WC) bf16 K-stacked block-banded weights
        #        (rows [0:WC] = dh=0, [WC:2WC] = dh=1, [2WC:3WC] = dh=2);
        #        the W halo lives inside the band structure.
        # Sublane halo via XLU roll: the wrapped rows are exactly the rows the
        # masks zero, so roll + mask == shift-with-zero-pad.
        up = jnp.where(has_above, pltpu.roll(x, shift=1, axis=0), 0.0)
        dn = jnp.where(has_below, pltpu.roll(x, shift=NH - 1, axis=0), 0.0)
        # One fused MXU matmul (K = 3*WC) instead of three; bf16 operands,
        # f32 accumulation.
        lhs = jnp.concatenate([up, x, dn], axis=1).astype(jnp.bfloat16)
        return jnp.dot(lhs, b_ref[...], preferred_element_type=jnp.float32)

    def channel_tiled_sum(v):
        # v: (R, WC).  Every lane ends up holding its channel's total over the
        # W lane-groups (W is a power of two); exact f32, XLU roll tree.
        t = v
        k = C
        while k < WC:
            t = t + pltpu.roll(t, shift=k, axis=1)
            k *= 2
        return t

    def bn(y, gamma_t, beta_t):
        # Training-mode BN (biased batch variance) folded into one per-lane
        # scale/shift FMA.  Sum and sum-of-squares are stacked so the roll
        # tree runs once on a (2, WC) array.
        s = jnp.concatenate(
            [jnp.sum(y, axis=0, keepdims=True),
             jnp.sum(y * y, axis=0, keepdims=True)], axis=0)        # (2, WC)
        t = channel_tiled_sum(s) * inv_m
        mean = t[0:1, :]
        var = t[1:2, :] - mean * mean
        scale = gamma_t * lax.rsqrt(var + eps)
        shift = beta_t - mean * scale
        return y * scale + shift

    x = xd_ref[...]                                                 # (NH, WC) f32

    h1 = jnp.maximum(bn(conv3x3(x, b1_ref), g1_ref[...], be1_ref[...]), 0.0)
    h2 = bn(conv3x3(h1, b2_ref), g2_ref[...], be2_ref[...])
    out_ref[...] = jnp.maximum(h2 + x, 0.0)                         # residual + relu


def _banded_conv_weights(w_oihw, W_img, C):
    """OIHW (Cout,Cin,3,3) -> (3*W*C, W*C) K-stacked block-banded bf16 matrix.

    For each kernel row dh, B[dh][wi*C+ci, wo*C+co] = W[dh, wi-wo+1, ci, co]
    for wi-wo in {-1,0,1}; out-of-range width taps are absent (== zero pad in
    W).  The three per-dh matrices are stacked along K in the order
    [dh=0; dh=1; dh=2], matching the kernel's [up | x | dn] LHS layout.
    """
    w = np.asarray(w_oihw, np.float32)
    w_hwio = np.transpose(w, (2, 3, 1, 0))              # (3, 3, Cin, Cout)
    WC = W_img * C
    B = np.zeros((3, WC, WC), np.float32)
    for dh in range(3):
        for dw in range(3):
            blk = w_hwio[dh, dw]                        # (Cin, Cout)
            for wo in range(W_img):
                wi = wo + dw - 1
                if 0 <= wi < W_img:
                    B[dh, wi * C:(wi + 1) * C, wo * C:(wo + 1) * C] = blk
    return jnp.asarray(B.reshape(3 * WC, WC), jnp.bfloat16)


def basic_block_pallas(x_nchw, w1_oihw, w2_oihw, g1, b1, g2, b2, eps=1e-5):
    """BasicBlock forward. x_nchw: (N, C, H, W) float32.  Returns NCHW."""
    N, C, H, W = x_nchw.shape
    WC = W * C
    assert WC % 128 == 0 and (W & (W - 1)) == 0, \
        "lane-dense layout assumes W*C a multiple of 128 and W a power of two"

    # TODO(synk): these NCHW<->NHWC transposes should be paid once per network
    # (keep activations lane-dense across blocks), not once per BasicBlock.
    x = jnp.transpose(x_nchw, (0, 2, 3, 1)).astype(jnp.float32)     # NHWC
    xd = x.reshape(N * H, WC)                                       # lane-dense view

    B1 = _banded_conv_weights(w1_oihw, W, C)
    B2 = _banded_conv_weights(w2_oihw, W, C)

    def tile_c(p):  # per-channel (C,) -> channel-tiled (1, W*C), f32
        return jnp.tile(jnp.asarray(p, jnp.float32).reshape(1, C), (1, W))

    kernel = functools.partial(_basic_block_kernel, N=N, H=H, W=W, C=C, eps=eps)
    vmem = pl.BlockSpec(memory_space=pltpu.MemorySpace.VMEM)

    out_dense = pl.pallas_call(
        kernel,
        out_shape=jax.ShapeDtypeStruct((N * H, WC), jnp.float32),
        in_specs=[vmem] * 7,
        out_specs=vmem,
    )(xd, B1, B2, tile_c(g1), tile_c(b1), tile_c(g2), tile_c(b2))

    return jnp.transpose(out_dense.reshape(N, H, W, C), (0, 3, 1, 2))  # NCHW


def basic_block_ref(x_nchw, w1_oihw, w2_oihw, g1, b1, g2, b2, eps=1e-5):
    """Pure-JAX reference (NHWC internally, full-precision convs)."""
    x = jnp.transpose(x_nchw, (0, 2, 3, 1)).astype(jnp.float32)
    w1 = jnp.transpose(w1_oihw, (2, 3, 1, 0)).astype(jnp.float32)
    w2 = jnp.transpose(w2_oihw, (2, 3, 1, 0)).astype(jnp.float32)

    def conv(xx, ww):
        return lax.conv_general_dilated(
            xx, ww, (1, 1), 'SAME',
            dimension_numbers=('NHWC', 'HWIO', 'NHWC'),
            precision=lax.Precision.HIGHEST)

    def bn(y, g, b):
        m = jnp.mean(y, axis=(0, 1, 2), keepdims=True)
        v = jnp.mean((y - m) ** 2, axis=(0, 1, 2), keepdims=True)
        return g * (y - m) / jnp.sqrt(v + eps) + b

    h = jax.nn.relu(bn(conv(x, w1), g1, b1))
    h = bn(conv(h, w2), g2, b2)
    out = jax.nn.relu(h + x)
    return jnp.transpose(out, (0, 3, 1, 2))


if __name__ == "__main__":
    # BasicBlock(inplanes=8, planes=8, stride=1, downsample=None)
    N, C, H, W = 2, 8, 16, 16

    key = jax.random.PRNGKey(0)
    kx, kw1, kw2, kg1, kb1, kg2, kb2 = jax.random.split(key, 7)

    x = jax.random.normal(kx, (N, C, H, W), jnp.float32)
    # Conv2d weights, PyTorch OIHW shape (planes, inplanes, 3, 3), no bias
    fan_in = C * 3 * 3
    w1 = jax.random.normal(kw1, (C, C, 3, 3), jnp.float32) / np.sqrt(fan_in)
    w2 = jax.random.normal(kw2, (C, C, 3, 3), jnp.float32) / np.sqrt(fan_in)
    # BatchNorm2d affine params (deterministic, non-trivial)
    g1 = 1.0 + 0.1 * jax.random.normal(kg1, (C,), jnp.float32)
    b1 = 0.1 * jax.random.normal(kb1, (C,), jnp.float32)
    g2 = 1.0 + 0.1 * jax.random.normal(kg2, (C,), jnp.float32)
    b2 = 0.1 * jax.random.normal(kb2, (C,), jnp.float32)

    out = jax.block_until_ready(basic_block_pallas(x, w1, w2, g1, b1, g2, b2))
    ref = jax.block_until_ready(basic_block_ref(x, w1, w2, g1, b1, g2, b2))

    assert out.shape == (N, C, H, W)
    # Kernel matmuls use bf16 operands with f32 accumulation while the
    # reference conv uses HIGHEST precision; 2e-2 comfortably covers that
    # rounding gap while still catching any structural error (which would be
    # O(1)).
    assert np.allclose(np.asarray(out), np.asarray(ref), rtol=2e-2, atol=2e-2), \
        "Pallas BasicBlock mismatch vs reference"

    print("KERNEL_OK")
</pallas_src>

<mosaic_0001>
module attributes {stable_mosaic.version = 11 : i64} {
  func.func @_basic_block_kernel(%arg0: memref<32x128xf32, #tpu.memory_space<vmem>>, %arg1: memref<384x128xbf16, #tpu.memory_space<vmem>>, %arg2: memref<384x128xbf16, #tpu.memory_space<vmem>>, %arg3: memref<1x128xf32, #tpu.memory_space<vmem>>, %arg4: memref<1x128xf32, #tpu.memory_space<vmem>>, %arg5: memref<1x128xf32, #tpu.memory_space<vmem>>, %arg6: memref<1x128xf32, #tpu.memory_space<vmem>>, %arg7: memref<32x128xf32, #tpu.memory_space<vmem>>) attributes {dimension_semantics = [], scalar_prefetch = 0 : i64, scratch_operands = 0 : i64, tpu.core_type = #tpu.core_type<tc>} {
    %0 = tpu.iota {dimensions = array<i32: 0>} : vector<32x1xi32>
    %c15_i32 = arith.constant 15 : i32
    %1 = vector.broadcast %c15_i32 : i32 to vector<32x1xi32>
    %2 = arith.andi %0, %1 : vector<32x1xi32>
    %c0_i32 = arith.constant 0 : i32
    %3 = vector.broadcast %c0_i32 : i32 to vector<32x1xi32>
    %4 = arith.cmpi ne, %2, %3 : vector<32x1xi32>
    %c15_i32_0 = arith.constant 15 : i32
    %5 = vector.broadcast %c15_i32_0 : i32 to vector<32x1xi32>
    %6 = arith.cmpi ne, %2, %5 : vector<32x1xi32>
    %c0 = arith.constant 0 : index
    %c0_1 = arith.constant 0 : index
    %7 = vector.load %arg0[%c0, %c0_1] : memref<32x128xf32, #tpu.memory_space<vmem>>, vector<32x128xf32>
    %c1_i32 = arith.constant 1 : i32
    %8 = tpu.dynamic_rotate %7 by %c1_i32 dim 0 : vector<32x128xf32>, i32 -> vector<32x128xf32>
    %cst = arith.constant 0.000000e+00 : f32
    %9 = vector.shape_cast %4 : vector<32x1xi1> to vector<32x1xi1>
    %10 = vector.broadcast %9 : vector<32x1xi1> to vector<32x128xi1>
    %11 = vector.broadcast %cst : f32 to vector<32x128xf32>
    %12 = arith.select %10, %8, %11 : vector<32x128xi1>, vector<32x128xf32>
    %c31_i32 = arith.constant 31 : i32
    %13 = tpu.dynamic_rotate %7 by %c31_i32 dim 0 : vector<32x128xf32>, i32 -> vector<32x128xf32>
    %cst_2 = arith.constant 0.000000e+00 : f32
    %14 = vector.shape_cast %6 : vector<32x1xi1> to vector<32x1xi1>
    %15 = vector.broadcast %14 : vector<32x1xi1> to vector<32x128xi1>
    %16 = vector.broadcast %cst_2 : f32 to vector<32x128xf32>
    %17 = arith.select %15, %13, %16 : vector<32x128xi1>, vector<32x128xf32>
    %18 = tpu.concatenate %12, %7, %17 in 1 : vector<32x128xf32>, vector<32x128xf32>, vector<32x128xf32> -> vector<32x384xf32>
    %19 = arith.truncf %18 : vector<32x384xf32> to vector<32x384xbf16>
    %c0_3 = arith.constant 0 : index
    %c0_4 = arith.constant 0 : index
    %20 = vector.load %arg1[%c0_3, %c0_4] : memref<384x128xbf16, #tpu.memory_space<vmem>>, vector<384x128xbf16>
    %cst_5 = arith.constant dense<0.000000e+00> : vector<32x128xf32>
    %21 = tpu.matmul %19, %20, %cst_5 {dimension_numbers = #tpu.dot_dimension_numbers<[1], [0], [0], [1], [0, 0, 1, 1], [], []>} : vector<32x384xbf16>, vector<384x128xbf16>, vector<32x128xf32> -> vector<32x128xf32>
    %c0_6 = arith.constant 0 : index
    %c0_7 = arith.constant 0 : index
    %22 = vector.load %arg3[%c0_6, %c0_7] : memref<1x128xf32, #tpu.memory_space<vmem>>, vector<1x128xf32>
    %c0_8 = arith.constant 0 : index
    %c0_9 = arith.constant 0 : index
    %23 = vector.load %arg4[%c0_8, %c0_9] : memref<1x128xf32, #tpu.memory_space<vmem>>, vector<1x128xf32>
    %cst_10 = arith.constant dense<0.000000e+00> : vector<128xf32>
    %24 = vector.multi_reduction <add>, %21, %cst_10 [0] : vector<32x128xf32> to vector<128xf32>
    %25 = vector.shape_cast %24 : vector<128xf32> to vector<1x128xf32>
    %26 = arith.mulf %21, %21 : vector<32x128xf32>
    %cst_11 = arith.constant dense<0.000000e+00> : vector<128xf32>
    %27 = vector.multi_reduction <add>, %26, %cst_11 [0] : vector<32x128xf32> to vector<128xf32>
    %28 = vector.shape_cast %27 : vector<128xf32> to vector<1x128xf32>
    %29 = tpu.concatenate %25, %28 in 0 : vector<1x128xf32>, vector<1x128xf32> -> vector<2x128xf32>
    %c8_i32 = arith.constant 8 : i32
    %30 = tpu.dynamic_rotate %29 by %c8_i32 dim 1 : vector<2x128xf32>, i32 -> vector<2x128xf32>
    %31 = arith.addf %29, %30 : vector<2x128xf32>
    %c16_i32 = arith.constant 16 : i32
    %32 = tpu.dynamic_rotate %31 by %c16_i32 dim 1 : vector<2x128xf32>, i32 -> vector<2x128xf32>
    %33 = arith.addf %31, %32 : vector<2x128xf32>
    %c32_i32 = arith.constant 32 : i32
    %34 = tpu.dynamic_rotate %33 by %c32_i32 dim 1 : vector<2x128xf32>, i32 -> vector<2x128xf32>
    %35 = arith.addf %33, %34 : vector<2x128xf32>
    %c64_i32 = arith.constant 64 : i32
    %36 = tpu.dynamic_rotate %35 by %c64_i32 dim 1 : vector<2x128xf32>, i32 -> vector<2x128xf32>
    %37 = arith.addf %35, %36 : vector<2x128xf32>
    %cst_12 = arith.constant 0.001953125 : f32
    %38 = vector.broadcast %cst_12 : f32 to vector<2x128xf32>
    %39 = arith.mulf %37, %38 : vector<2x128xf32>
    %40 = vector.extract_strided_slice %39 {offsets = [0, 0], sizes = [1, 128], strides = [1, 1]} : vector<2x128xf32> to vector<1x128xf32>
    %41 = vector.extract_strided_slice %39 {offsets = [1, 0], sizes = [1, 128], strides = [1, 1]} : vector<2x128xf32> to vector<1x128xf32>
    %42 = arith.mulf %40, %40 : vector<1x128xf32>
    %43 = arith.subf %41, %42 : vector<1x128xf32>
    %cst_13 = arith.constant 9.99999974E-6 : f32
    %44 = vector.broadcast %cst_13 : f32 to vector<1x128xf32>
    %45 = arith.addf %43, %44 : vector<1x128xf32>
    %46 = math.rsqrt %45 : vector<1x128xf32>
    %47 = arith.mulf %22, %46 : vector<1x128xf32>
    %48 = arith.mulf %40, %47 : vector<1x128xf32>
    %49 = arith.subf %23, %48 : vector<1x128xf32>
    %50 = vector.broadcast %47 : vector<1x128xf32> to vector<32x128xf32>
    %51 = arith.mulf %21, %50 : vector<32x128xf32>
    %52 = vector.broadcast %49 : vector<1x128xf32> to vector<32x128xf32>
    %53 = arith.addf %51, %52 : vector<32x128xf32>
    %cst_14 = arith.constant 0.000000e+00 : f32
    %54 = vector.broadcast %cst_14 : f32 to vector<32x128xf32>
    %55 = arith.maximumf %53, %54 : vector<32x128xf32>
    %c1_i32_15 = arith.constant 1 : i32
    %56 = tpu.dynamic_rotate %55 by %c1_i32_15 dim 0 : vector<32x128xf32>, i32 -> vector<32x128xf32>
    %cst_16 = arith.constant 0.000000e+00 : f32
    %57 = vector.shape_cast %4 : vector<32x1xi1> to vector<32x1xi1>
    %58 = vector.broadcast %57 : vector<32x1xi1> to vector<32x128xi1>
    %59 = vector.broadcast %cst_16 : f32 to vector<32x128xf32>
    %60 = arith.select %58, %56, %59 : vector<32x128xi1>, vector<32x128xf32>
    %c31_i32_17 = arith.constant 31 : i32
    %61 = tpu.dynamic_rotate %55 by %c31_i32_17 dim 0 : vector<32x128xf32>, i32 -> vector<32x128xf32>
    %cst_18 = arith.constant 0.000000e+00 : f32
    %62 = vector.shape_cast %6 : vector<32x1xi1> to vector<32x1xi1>
    %63 = vector.broadcast %62 : vector<32x1xi1> to vector<32x128xi1>
    %64 = vector.broadcast %cst_18 : f32 to vector<32x128xf32>
    %65 = arith.select %63, %61, %64 : vector<32x128xi1>, vector<32x128xf32>
    %66 = tpu.concatenate %60, %55, %65 in 1 : vector<32x128xf32>, vector<32x128xf32>, vector<32x128xf32> -> vector<32x384xf32>
    %67 = arith.truncf %66 : vector<32x384xf32> to vector<32x384xbf16>
    %c0_19 = arith.constant 0 : index
    %c0_20 = arith.constant 0 : index
    %68 = vector.load %arg2[%c0_19, %c0_20] : memref<384x128xbf16, #tpu.memory_space<vmem>>, vector<384x128xbf16>
    %cst_21 = arith.constant dense<0.000000e+00> : vector<32x128xf32>
    %69 = tpu.matmul %67, %68, %cst_21 {dimension_numbers = #tpu.dot_dimension_numbers<[1], [0], [0], [1], [0, 0, 1, 1], [], []>} : vector<32x384xbf16>, vector<384x128xbf16>, vector<32x128xf32> -> vector<32x128xf32>
    %c0_22 = arith.constant 0 : index
    %c0_23 = arith.constant 0 : index
    %70 = vector.load %arg5[%c0_22, %c0_23] : memref<1x128xf32, #tpu.memory_space<vmem>>, vector<1x128xf32>
    %c0_24 = arith.constant 0 : index
    %c0_25 = arith.constant 0 : index
    %71 = vector.load %arg6[%c0_24, %c0_25] : memref<1x128xf32, #tpu.memory_space<vmem>>, vector<1x128xf32>
    %cst_26 = arith.constant dense<0.000000e+00> : vector<128xf32>
    %72 = vector.multi_reduction <add>, %69, %cst_26 [0] : vector<32x128xf32> to vector<128xf32>
    %73 = vector.shape_cast %72 : vector<128xf32> to vector<1x128xf32>
    %74 = arith.mulf %69, %69 : vector<32x128xf32>
    %cst_27 = arith.constant dense<0.000000e+00> : vector<128xf32>
    %75 = vector.multi_reduction <add>, %74, %cst_27 [0] : vector<32x128xf32> to vector<128xf32>
    %76 = vector.shape_cast %75 : vector<128xf32> to vector<1x128xf32>
    %77 = tpu.concatenate %73, %76 in 0 : vector<1x128xf32>, vector<1x128xf32> -> vector<2x128xf32>
    %c8_i32_28 = arith.constant 8 : i32
    %78 = tpu.dynamic_rotate %77 by %c8_i32_28 dim 1 : vector<2x128xf32>, i32 -> vector<2x128xf32>
    %79 = arith.addf %77, %78 : vector<2x128xf32>
    %c16_i32_29 = arith.constant 16 : i32
    %80 = tpu.dynamic_rotate %79 by %c16_i32_29 dim 1 : vector<2x128xf32>, i32 -> vector<2x128xf32>
    %81 = arith.addf %79, %80 : vector<2x128xf32>
    %c32_i32_30 = arith.constant 32 : i32
    %82 = tpu.dynamic_rotate %81 by %c32_i32_30 dim 1 : vector<2x128xf32>, i32 -> vector<2x128xf32>
    %83 = arith.addf %81, %82 : vector<2x128xf32>
    %c64_i32_31 = arith.constant 64 : i32
    %84 = tpu.dynamic_rotate %83 by %c64_i32_31 dim 1 : vector<2x128xf32>, i32 -> vector<2x128xf32>
    %85 = arith.addf %83, %84 : vector<2x128xf32>
    %cst_32 = arith.constant 0.001953125 : f32
    %86 = vector.broadcast %cst_32 : f32 to vector<2x128xf32>
    %87 = arith.mulf %85, %86 : vector<2x128xf32>
    %88 = vector.extract_strided_slice %87 {offsets = [0, 0], sizes = [1, 128], strides = [1, 1]} : vector<2x128xf32> to vector<1x128xf32>
    %89 = vector.extract_strided_slice %87 {offsets = [1, 0], sizes = [1, 128], strides = [1, 1]} : vector<2x128xf32> to vector<1x128xf32>
    %90 = arith.mulf %88, %88 : vector<1x128xf32>
    %91 = arith.subf %89, %90 : vector<1x128xf32>
    %cst_33 = arith.constant 9.99999974E-6 : f32
    %92 = vector.broadcast %cst_33 : f32 to vector<1x128xf32>
    %93 = arith.addf %91, %92 : vector<1x128xf32>
    %94 = math.rsqrt %93 : vector<1x128xf32>
    %95 = arith.mulf %70, %94 : vector<1x128xf32>
    %96 = arith.mulf %88, %95 : vector<1x128xf32>
    %97 = arith.subf %71, %96 : vector<1x128xf32>
    %98 = vector.broadcast %95 : vector<1x128xf32> to vector<32x128xf32>
    %99 = arith.mulf %69, %98 : vector<32x128xf32>
    %100 = vector.broadcast %97 : vector<1x128xf32> to vector<32x128xf32>
    %101 = arith.addf %99, %100 : vector<32x128xf32>
    %102 = arith.addf %101, %7 : vector<32x128xf32>
    %cst_34 = arith.constant 0.000000e+00 : f32
    %103 = vector.broadcast %cst_34 : f32 to vector<32x128xf32>
    %104 = arith.maximumf %102, %103 : vector<32x128xf32>
    %c0_35 = arith.constant 0 : index
    %c0_36 = arith.constant 0 : index
    %105 = vector.load %arg7[%c0_35, %c0_36] : memref<32x128xf32, #tpu.memory_space<vmem>>, vector<32x128xf32>
    tpu.vector_store %arg7[%c0_35, %c0_36], %104 {strides = array<i32>} : memref<32x128xf32, #tpu.memory_space<vmem>>, vector<32x128xf32>,
    return
  }
}

</mosaic_0001>

<llo_original>
// kernel: tpu_custom_call.1
$region0: #{tpu_custom_call.1}
  #allocation0 [shape = 'u32[]', space=smem, size = 0x4, offset = 0x4, fixed_abs, tag = 'smem constant byte address 0x4 - core index']
  #allocation1 [shape = 'u32[72,128]{1,0:T(1,128)}', space=vmem, size = 0x9000, scoped, tag = 'internal scratch']
  %s0 = inlined_call_operand.hbm [shape: f32[32,128], index: 0, kind: input, shape index: {}]
  %s1 = inlined_call_operand.hbm [shape: bf16[384,128], index: 1, kind: input, shape index: {}]
  %s2 = inlined_call_operand.hbm [shape: bf16[384,128], index: 2, kind: input, shape index: {}]
  %s3 = inlined_call_operand.vmem [shape: f32[1,128], index: 3, kind: input, shape index: {}]
  %s4 = inlined_call_operand.vmem [shape: f32[1,128], index: 4, kind: input, shape index: {}]
  %s5 = inlined_call_operand.vmem [shape: f32[1,128], index: 5, kind: input, shape index: {}]
  %s6 = inlined_call_operand.vmem [shape: f32[1,128], index: 6, kind: input, shape index: {}]
  %s7 = inlined_call_operand.hbm [shape: f32[32,128], index: 7, kind: output, shape index: {}]
  %s8 = sld [smem:[#allocation0]]
  $region50: #{tpu_custom_call.1} parent=0
    _
  %s10 = ssub.s32 1, %s8
  %s11 = scalar_select 0, %s10, %s8
  $region1: #{tpu_custom_call.1} parent=0
    #allocation2 [shape = 'u8[16384]{0}', space=vmem, size = 0x4000, scoped, tag = 'input window, operand 0, single buffered']
    #allocation3 [shape = 's32[1]{0}', space=sflag, size = 0x4, scoped, tag = 'scoped memory for tpu_custom_call.1']
    #allocation4 [shape = 's32[1]{0}', space=sflag, size = 0x4, scoped, tag = 'scoped memory for tpu_custom_call.1']
    #allocation5 [shape = 'u8[98304]{0}', space=vmem, size = 0x18000, scoped, tag = 'input window, operand 1, single buffered']
    #allocation6 [shape = 's32[1]{0}', space=sflag, size = 0x4, scoped, tag = 'scoped memory for tpu_custom_call.1']
    #allocation7 [shape = 'u8[98304]{0}', space=vmem, size = 0x18000, scoped, tag = 'input window, operand 2, single buffered']
    #allocation8 [shape = 'u8[16384]{0}', space=vmem, size = 0x4000, scoped, tag = 'output window, operand 0, single buffered']
    %12 = vsyncpa [#allocation3], 0
    %13 = vsyncpa [#allocation6], 0
    %14 = vsyncpa [#allocation4], 0
    // Predicated region
    $region2: #{tpu_custom_call.1} parent=1 // pred_check
      _
    $region3: #{tpu_custom_call.1} parent=1 // pred_check_branch
      %16 = sbr.rel (0) target = $region5
    $region4: #{tpu_custom_call.1} parent=1 // pred_region
      %18 = vsyncadd [#allocation3], 0
      %s19 = sshll.u32 %s0, 4
      %s20 = int_to_ptr.hbm [resolvable:$true] %s19
      %s21 = sshll.u32 [#allocation2], 4
      %s22 = int_to_ptr.vmem [resolvable:$true] %s21
      %27 = dma.hbm_to_vmem [thread:$0]  %s20, 512, %s22, [#allocation3], 128, 128, 8
    $region5: #{tpu_custom_call.1} parent=1 // pred_fallthru
      _
    // Predicated region
    $region6: #{tpu_custom_call.1} parent=1 // pred_check
      _
    $region7: #{tpu_custom_call.1} parent=1 // pred_check_branch
      %29 = sbr.rel (0) target = $region9
    $region8: #{tpu_custom_call.1} parent=1 // pred_region
      %31 = vsyncadd [#allocation6], 0
      %s32 = sshll.u32 %s1, 4
      %s33 = int_to_ptr.hbm [resolvable:$true] %s32
      %s34 = sshll.u32 [#allocation5], 4
      %s35 = int_to_ptr.vmem [resolvable:$true] %s34
      %40 = dma.hbm_to_vmem [thread:$0]  %s33, 3072, %s35, [#allocation6], 64, 64, 4
    $region9: #{tpu_custom_call.1} parent=1 // pred_fallthru
      _
    // Predicated region
    $region10: #{tpu_custom_call.1} parent=1 // pred_check
      _
    $region11: #{tpu_custom_call.1} parent=1 // pred_check_branch
      %42 = sbr.rel (0) target = $region13
    $region12: #{tpu_custom_call.1} parent=1 // pred_region
      %44 = vsyncadd [#allocation6], 0
      %s45 = sshll.u32 %s2, 4
      %s46 = int_to_ptr.hbm [resolvable:$true] %s45
      %s47 = sshll.u32 [#allocation7], 4
      %s48 = int_to_ptr.vmem [resolvable:$true] %s47
      %53 = dma.hbm_to_vmem [thread:$0]  %s46, 3072, %s48, [#allocation6], 64, 64, 4
    $region13: #{tpu_custom_call.1} parent=1 // pred_fallthru
      _
    // Predicated region
    $region14: #{tpu_custom_call.1} parent=1 // pred_check
      _
    $region15: #{tpu_custom_call.1} parent=1 // pred_check_branch
      %55 = sbr.rel (0) target = $region17
    $region16: #{tpu_custom_call.1} parent=1 // pred_region
      _
    $region17: #{tpu_custom_call.1} parent=1 // pred_fallthru
      _
    // Predicated region
    $region18: #{tpu_custom_call.1} parent=1 // pred_check
      _
    $region19: #{tpu_custom_call.1} parent=1 // pred_check_branch
      %57 = sbr.rel (0) target = $region21
    $region20: #{tpu_custom_call.1} parent=1 // pred_region
      _
    $region21: #{tpu_custom_call.1} parent=1 // pred_fallthru
      _
    // Predicated region
    $region22: #{tpu_custom_call.1} parent=1 // pred_check
      _
    $region23: #{tpu_custom_call.1} parent=1 // pred_check_branch
      %59 = sbr.rel (0) target = $region25
    $region24: #{tpu_custom_call.1} parent=1 // pred_region
      _
    $region25: #{tpu_custom_call.1} parent=1 // pred_fallthru
      _
    // Predicated region
    $region26: #{tpu_custom_call.1} parent=1 // pred_check
      _
    $region27: #{tpu_custom_call.1} parent=1 // pred_check_branch
      %61 = sbr.rel (0) target = $region29
    $region28: #{tpu_custom_call.1} parent=1 // pred_region
      _
    $region29: #{tpu_custom_call.1} parent=1 // pred_fallthru
      _
    // Predicated region
    $region30: #{tpu_custom_call.1} parent=1 // pred_check
      _
    $region31: #{tpu_custom_call.1} parent=1 // pred_check_branch
      %63 = sbr.rel (0) target = $region33
    $region32: #{tpu_custom_call.1} parent=1 // pred_region
      %65 = dma.done [#allocation3], 512
    $region33: #{tpu_custom_call.1} parent=1 // pred_fallthru
      _
    // Predicated region
    $region34: #{tpu_custom_call.1} parent=1 // pred_check
      _
    $region35: #{tpu_custom_call.1} parent=1 // pred_check_branch
      %67 = sbr.rel (0) target = $region37
    $region36: #{tpu_custom_call.1} parent=1 // pred_region
      %69 = dma.done [#allocation6], 3072
    $region37: #{tpu_custom_call.1} parent=1 // pred_fallthru
      _
    // Predicated region
    $region38: #{tpu_custom_call.1} parent=1 // pred_check
      _
    $region39: #{tpu_custom_call.1} parent=1 // pred_check_branch
      %71 = sbr.rel (0) target = $region41
    $region40: #{tpu_custom_call.1} parent=1 // pred_region
      %73 = dma.done [#allocation6], 3072
    $region41: #{tpu_custom_call.1} parent=1 // pred_fallthru
      _
    %v74 = vlaneseq
    %v75 = vshrl.u32 %v74, 7
    %v76 = vadd.s32 %v75, 8
    %v77 = vadd.s32 %v75, 16
    %v78 = vadd.s32 %v75, 24
    %v79 = vand.u32 %v75, 15
    %v80 = vand.u32 %v76, 15
    %v81 = vand.u32 %v77, 15
    %v82 = vand.u32 %v78, 15
    %vm83 = vcmp.ne.s32.totalorder %v79, 0
    %vm84 = vcmp.ne.s32.totalorder %v80, 0
    %vm85 = vcmp.ne.s32.totalorder %v81, 0
    %vm86 = vcmp.ne.s32.totalorder %v82, 0
    %vm87 = vcmp.ne.s32.totalorder %v79, 15
    %vm88 = vcmp.ne.s32.totalorder %v80, 15
    %vm89 = vcmp.ne.s32.totalorder %v81, 15
    %vm90 = vcmp.ne.s32.totalorder %v82, 15
    %v91 = vld [vmem:[#allocation2] sm:$0xff]
    %v92 = vld [vmem:[#allocation2 + $0x8] sm:$0xff]
    %v93 = vld [vmem:[#allocation2 + $0x10] sm:$0xff]
    %v94 = vld [vmem:[#allocation2 + $0x18] sm:$0xff]
    %v95 = vrot.slane %v91, 7
    %v96 = vrot.slane %v92, 7
    %v97 = vrot.slane %v93, 7
    %v98 = vrot.slane %v94, 7
    %vm99 = vcmp.lt.s32.totalorder %v75, 1
    %v100 = vsel %vm99, %v97, %v98
    %v101 = vsel %vm99, %v96, %v97
    %v102 = vsel %vm99, %v95, %v96
    %v103 = vsel %vm99, %v98, %v95
    %v104 = vsel %vm83, 1, 0
    %v105 = vsel %vm84, 1, 0
    %v106 = vsel %vm85, 1, 0
    %v107 = vsel %vm86, 1, 0
    %vm108 = vcmp.eq.s32.totalorder %v104, 1
    %vm109 = vcmp.eq.s32.totalorder %v105, 1
    %vm110 = vcmp.eq.s32.totalorder %v106, 1
    %vm111 = vcmp.eq.s32.totalorder %v107, 1
    %v112 = vsel %vm108, %v103, 0.0
    %v113 = vsel %vm109, %v102, 0.0
    %v114 = vsel %vm110, %v101, 0.0
    %v115 = vsel %vm111, %v100, 0.0
    %v116 = vrot.slane %v91, 1
    %v117 = vrot.slane %v92, 1
    %v118 = vrot.slane %v93, 1
    %v119 = vrot.slane %v94, 1
    %vm120 = vcmp.lt.s32.totalorder %v75, 7
    %v121 = vsel %vm120, %v118, %v119
    %v122 = vsel %vm120, %v117, %v118
    %v123 = vsel %vm120, %v116, %v117
    %v124 = vsel %vm120, %v119, %v116
    %v125 = vsel %vm87, 1, 0
    %v126 = vsel %vm88, 1, 0
    %v127 = vsel %vm89, 1, 0
    %v128 = vsel %vm90, 1, 0
    %vm129 = vcmp.eq.s32.totalorder %v125, 1
    %vm130 = vcmp.eq.s32.totalorder %v126, 1
    %vm131 = vcmp.eq.s32.totalorder %v127, 1
    %vm132 = vcmp.eq.s32.totalorder %v128, 1
    %v133 = vsel %vm129, %v123, 0.0
    %v134 = vsel %vm130, %v122, 0.0
    %v135 = vsel %vm131, %v121, 0.0
    %v136 = vsel %vm132, %v124, 0.0
    %v137 = vpack.c.bf16 %v113, %v112
    %v138 = vpack.c.bf16 %v92, %v91
    %v139 = vpack.c.bf16 %v134, %v133
    %v140 = vpack.c.bf16 %v115, %v114
    %v141 = vpack.c.bf16 %v94, %v93
    %v142 = vpack.c.bf16 %v136, %v135
    %v143 = vld [vmem:[#allocation5] sm:$0xf]
    %v144 = vld [vmem:[#allocation5 + $0x4] sm:$0xf]
    %v145 = vld [vmem:[#allocation5 + $0x8] sm:$0xf]
    %v146 = vld [vmem:[#allocation5 + $0xc] sm:$0xf]
    %v147 = vld [vmem:[#allocation5 + $0x10] sm:$0xf]
    %v148 = vld [vmem:[#allocation5 + $0x14] sm:$0xf]
    %v149 = vld [vmem:[#allocation5 + $0x18] sm:$0xf]
    %v150 = vld [vmem:[#allocation5 + $0x1c] sm:$0xf]
    %v151 = vld [vmem:[#allocation5 + $0x20] sm:$0xf]
    %v152 = vld [vmem:[#allocation5 + $0x24] sm:$0xf]
    %v153 = vld [vmem:[#allocation5 + $0x28] sm:$0xf]
    %v154 = vld [vmem:[#allocation5 + $0x2c] sm:$0xf]
    %v155 = vld [vmem:[#allocation5 + $0x30] sm:$0xf]
    %v156 = vld [vmem:[#allocation5 + $0x34] sm:$0xf]
    %v157 = vld [vmem:[#allocation5 + $0x38] sm:$0xf]
    %v158 = vld [vmem:[#allocation5 + $0x3c] sm:$0xf]
    %v159 = vld [vmem:[#allocation5 + $0x40] sm:$0xf]
    %v160 = vld [vmem:[#allocation5 + $0x44] sm:$0xf]
    %v161 = vld [vmem:[#allocation5 + $0x48] sm:$0xf]
    %v162 = vld [vmem:[#allocation5 + $0x4c] sm:$0xf]
    %v163 = vld [vmem:[#allocation5 + $0x50] sm:$0xf]
    %v164 = vld [vmem:[#allocation5 + $0x54] sm:$0xf]
    %v165 = vld [vmem:[#allocation5 + $0x58] sm:$0xf]
    %v166 = vld [vmem:[#allocation5 + $0x5c] sm:$0xf]
    %v167 = vld [vmem:[#allocation5 + $0x60] sm:$0xf]
    %v168 = vld [vmem:[#allocation5 + $0x64] sm:$0xf]
    %v169 = vld [vmem:[#allocation5 + $0x68] sm:$0xf]
    %v170 = vld [vmem:[#allocation5 + $0x6c] sm:$0xf]
    %v171 = vld [vmem:[#allocation5 + $0x70] sm:$0xf]
    %v172 = vld [vmem:[#allocation5 + $0x74] sm:$0xf]
    %v173 = vld [vmem:[#allocation5 + $0x78] sm:$0xf]
    %v174 = vld [vmem:[#allocation5 + $0x7c] sm:$0xf]
    %v175 = vld [vmem:[#allocation5 + $0x80] sm:$0xf]
    %v176 = vld [vmem:[#allocation5 + $0x84] sm:$0xf]
    %v177 = vld [vmem:[#allocation5 + $0x88] sm:$0xf]
    %v178 = vld [vmem:[#allocation5 + $0x8c] sm:$0xf]
    %v179 = vld [vmem:[#allocation5 + $0x90] sm:$0xf]
    %v180 = vld [vmem:[#allocation5 + $0x94] sm:$0xf]
    %v181 = vld [vmem:[#allocation5 + $0x98] sm:$0xf]
    %v182 = vld [vmem:[#allocation5 + $0x9c] sm:$0xf]
    %v183 = vld [vmem:[#allocation5 + $0xa0] sm:$0xf]
    %v184 = vld [vmem:[#allocation5 + $0xa4] sm:$0xf]
    %v185 = vld [vmem:[#allocation5 + $0xa8] sm:$0xf]
    %v186 = vld [vmem:[#allocation5 + $0xac] sm:$0xf]
    %v187 = vld [vmem:[#allocation5 + $0xb0] sm:$0xf]
    %v188 = vld [vmem:[#allocation5 + $0xb4] sm:$0xf]
    %v189 = vld [vmem:[#allocation5 + $0xb8] sm:$0xf]
    %v190 = vld [vmem:[#allocation5 + $0xbc] sm:$0xf]
    %v239 = vunpack.c.l.b16 %v143
    %v240 = vunpack.c.l.b16 %v144
    %v241 = vunpack.c.l.b16 %v145
    %v242 = vunpack.c.l.b16 %v146
    %v243 = vunpack.c.l.b16 %v147
    %v244 = vunpack.c.l.b16 %v148
    %v245 = vunpack.c.l.b16 %v149
    %v246 = vunpack.c.l.b16 %v150
    %v247 = vunpack.c.l.b16 %v151
    %v248 = vunpack.c.l.b16 %v152
    %v249 = vunpack.c.l.b16 %v153
    %v250 = vunpack.c.l.b16 %v154
    %v251 = vunpack.c.l.b16 %v155
    %v252 = vunpack.c.l.b16 %v156
    %v253 = vunpack.c.l.b16 %v157
    %v254 = vunpack.c.l.b16 %v158
    %v255 = vunpack.c.l.b16 %v159
    %v256 = vunpack.c.l.b16 %v160
    %v257 = vunpack.c.l.b16 %v161
    %v258 = vunpack.c.l.b16 %v162
    %v259 = vunpack.c.l.b16 %v163
    %v260 = vunpack.c.l.b16 %v164
    %v261 = vunpack.c.l.b16 %v165
    %v262 = vunpack.c.l.b16 %v166
    %v263 = vunpack.c.l.b16 %v167
    %v264 = vunpack.c.l.b16 %v168
    %v265 = vunpack.c.l.b16 %v169
    %v266 = vunpack.c.l.b16 %v170
    %v267 = vunpack.c.l.b16 %v171
    %v268 = vunpack.c.l.b16 %v172
    %v269 = vunpack.c.l.b16 %v173
    %v270 = vunpack.c.l.b16 %v174
    %v271 = vunpack.c.l.b16 %v175
    %v272 = vunpack.c.l.b16 %v176
    %v273 = vunpack.c.l.b16 %v177
    %v274 = vunpack.c.l.b16 %v178
    %v275 = vunpack.c.l.b16 %v179
    %v276 = vunpack.c.l.b16 %v180
    %v277 = vunpack.c.l.b16 %v181
    %v278 = vunpack.c.l.b16 %v182
    %v279 = vunpack.c.l.b16 %v183
    %v280 = vunpack.c.l.b16 %v184
    %v281 = vunpack.c.l.b16 %v185
    %v282 = vunpack.c.l.b16 %v186
    %v283 = vunpack.c.l.b16 %v187
    %v284 = vunpack.c.l.b16 %v188
    %v285 = vunpack.c.l.b16 %v189
    %v286 = vunpack.c.l.b16 %v190
    %v287 = vpack.c.b16 %v240, %v239
    %v288 = vpack.c.b16 %v242, %v241
    %v289 = vpack.c.b16 %v244, %v243
    %v290 = vpack.c.b16 %v246, %v245
    %v291 = vpack.c.b16 %v248, %v247
    %v292 = vpack.c.b16 %v250, %v249
    %v293 = vpack.c.b16 %v252, %v251
    %v294 = vpack.c.b16 %v254, %v253
    %v295 = vpack.c.b16 %v256, %v255
    %v296 = vpack.c.b16 %v258, %v257
    %v297 = vpack.c.b16 %v260, %v259
    %v298 = vpack.c.b16 %v262, %v261
    %v299 = vpack.c.b16 %v264, %v263
    %v300 = vpack.c.b16 %v266, %v265
    %v301 = vpack.c.b16 %v268, %v267
    %v302 = vpack.c.b16 %v270, %v269
    %v303 = vpack.c.b16 %v272, %v271
    %v304 = vpack.c.b16 %v274, %v273
    %v305 = vpack.c.b16 %v276, %v275
    %v306 = vpack.c.b16 %v278, %v277
    %v307 = vpack.c.b16 %v280, %v279
    %v308 = vpack.c.b16 %v282, %v281
    %v309 = vpack.c.b16 %v284, %v283
    %v310 = vpack.c.b16 %v286, %v285
    %335 = vmatpush.bf16.msra.mxu0 %v294
    %336 = vmatpush.bf16.msra.mxu0 %v293
    %337 = vmatpush.bf16.msra.mxu0 %v292
    %338 = vmatpush.bf16.msra.mxu0 %v291
    %339 = vmatpush.bf16.msra.mxu0 %v290
    %340 = vmatpush.bf16.msra.mxu0 %v289
    %341 = vmatpush.bf16.msra.mxu0 %v288
    %342 = vmatpush.bf16.msra.mxu0 %v287
    %343 = vmatmul.bf16.gmra.mxu0 %v137
    %v344 = vpop.f32.mrf.mxu0
    %v345 = vadd.f32 0.0, %v344
    %v346 = vpop.f32.mrf.mxu0
    %v347 = vadd.f32 0.0, %v346
    %348 = vmatmul.bf16.gmra.mxu0 %v140
    %v349 = vpop.f32.mrf.mxu0
    %v350 = vadd.f32 0.0, %v349
    %v351 = vpop.f32.mrf.mxu0
    %v352 = vadd.f32 0.0, %v351
    %353 = vdwg.mxu0
    %354 = vmatpush.bf16.msra.mxu0 %v302
    %355 = vmatpush.bf16.msra.mxu0 %v301
    %356 = vmatpush.bf16.msra.mxu0 %v300
    %357 = vmatpush.bf16.msra.mxu0 %v299
    %358 = vmatpush.bf16.msra.mxu0 %v298
    %359 = vmatpush.bf16.msra.mxu0 %v297
    %360 = vmatpush.bf16.msra.mxu0 %v296
    %361 = vmatpush.bf16.msra.mxu0 %v295
    %362 = vmatmul.bf16.gmra.mxu0 %v138
    %v363 = vpop.f32.mrf.mxu0
    %v364 = vadd.f32 %v345, %v363
    %v365 = vpop.f32.mrf.mxu0
    %v366 = vadd.f32 %v347, %v365
    %367 = vmatmul.bf16.gmra.mxu0 %v141
    %v368 = vpop.f32.mrf.mxu0
    %v369 = vadd.f32 %v350, %v368
    %v370 = vpop.f32.mrf.mxu0
    %v371 = vadd.f32 %v352, %v370
    %372 = vdwg.mxu0
    %373 = vmatpush.bf16.msra.mxu0 %v310
    %374 = vmatpush.bf16.msra.mxu0 %v309
    %375 = vmatpush.bf16.msra.mxu0 %v308
    %376 = vmatpush.bf16.msra.mxu0 %v307
    %377 = vmatpush.bf16.msra.mxu0 %v306
    %378 = vmatpush.bf16.msra.mxu0 %v305
    %379 = vmatpush.bf16.msra.mxu0 %v304
    %380 = vmatpush.bf16.msra.mxu0 %v303
    %381 = vmatmul.bf16.gmra.mxu0 %v139
    %v382 = vpop.f32.mrf.mxu0
    %v383 = vadd.f32 %v364, %v382
    %v384 = vpop.f32.mrf.mxu0
    %v385 = vadd.f32 %v366, %v384
    %386 = vmatmul.bf16.gmra.mxu0 %v142
    %v387 = vpop.f32.mrf.mxu0
    %v388 = vadd.f32 %v369, %v387
    %v389 = vpop.f32.mrf.mxu0
    %v390 = vadd.f32 %v371, %v389
    %391 = vdwg.mxu0
    %v392 = vld [vmem:[%s3] sm:$0x1]
    %v393 = vld [vmem:[%s4] sm:$0x1]
    %v394 = vadd.f32 %v383, %v385
    %v395 = vadd.f32 %v394, %v388
    %v396 = vadd.f32 %v395, %v390
    %v397 = vrot.slane %v396, 4
    %v398 = vadd.f32 %v396, %v397
    %v399 = vrot.slane %v398, 2
    %v400 = vadd.f32 %v398, %v399
    %v401 = vrot.slane %v400, 1
    %v402 = vadd.f32 %v400, %v401
    %v403 = vmul.f32 %v383, %v383
    %v404 = vmul.f32 %v385, %v385
    %v405 = vmul.f32 %v388, %v388
    %v406 = vmul.f32 %v390, %v390
    %v407 = vadd.f32 %v403, %v404
    %v408 = vadd.f32 %v407, %v405
    %v409 = vadd.f32 %v408, %v406
    %v410 = vrot.slane %v409, 4
    %v411 = vadd.f32 %v409, %v410
    %v412 = vrot.slane %v411, 2
    %v413 = vadd.f32 %v411, %v412
    %v414 = vrot.slane %v413, 1
    %v415 = vadd.f32 %v413, %v414
    %vm416 = vcmask 1040384
    %v417 = vsel %vm416, %v402, %v415
    %418 = vrot.lane.b32.xlu0 %v417, 8
    %v419 = vpop.permute.xlu0 %418
    %v420 = vadd.f32 %v417, %v419
    %421 = vrot.lane.b32.xlu0 %v420, 16
    %v422 = vpop.permute.xlu0 %421
    %v423 = vadd.f32 %v420, %v422
    %424 = vrot.lane.b32.xlu0 %v423, 32
    %v425 = vpop.permute.xlu0 %424
    %v426 = vadd.f32 %v423, %v425
    %427 = vrot.lane.b32.xlu0 %v426, 64
    %v428 = vpop.permute.xlu0 %427
    %v429 = vadd.f32 %v426, %v428
    %v430 = vmul.f32 %v429, 0.001953125
    %v431 = vmul.f32 %v430, %v430
    %v433 = vrot.slane %v431, 7
    %v435 = vsub.f32 %v430, %v433
    %v436 = vadd.f32 %v435, 1e-05
    %v437 = vrsqrt.pop %v436
    %v438 = vmul.f32 %v437, %v436
    %v439 = vmul.f32 %v438, %v437
    %v440 = vmul.f32 0.5, %v439
    %v441 = vsub.f32 1.5, %v440
    %v442 = vmul.f32 %v437, %v441
    %vm443 = vweird.f32 %v436
    %vm444 = vweird.f32 %v437
    %vm445 = vmor %vm443, %vm444
    %v446 = vsel %vm445, %v437, %v442
    %448 = vst [vmem:[#allocation1] sm:$0xff] %v446
    %s449 = scalar_lea.vmem [#allocation1], 1
    %v450 = vld [vmem:[%s449] ss:$9 sm:$0xff]
    %v452 = vmul.f32 %v392, %v450
    %v453 = vmul.f32 %v430, %v452
    %v454 = vsub.f32 %v393, %v453
    %v456 = vperm.slane %v452, 0
    %v458 = vmul.f32 %v383, %v456
    %v459 = vmul.f32 %v385, %v456
    %v460 = vmul.f32 %v388, %v456
    %v461 = vmul.f32 %v390, %v456
    %v463 = vperm.slane %v454, 0
    %v465 = vadd.f32 %v458, %v463
    %v466 = vadd.f32 %v459, %v463
    %v467 = vadd.f32 %v460, %v463
    %v468 = vadd.f32 %v461, %v463
    %v469 = vmax.f32 %v465, 0.0
    %v470 = vmax.f32 %v466, 0.0
    %v471 = vmax.f32 %v467, 0.0
    %v472 = vmax.f32 %v468, 0.0
    %v473 = vrot.slane %v469, 7
    %v474 = vrot.slane %v470, 7
    %v475 = vrot.slane %v471, 7
    %v476 = vrot.slane %v472, 7
    %v477 = vsel %vm99, %v475, %v476
    %v478 = vsel %vm99, %v474, %v475
    %v479 = vsel %vm99, %v473, %v474
    %v480 = vsel %vm99, %v476, %v473
    %v481 = vsel %vm108, %v480, 0.0
    %v482 = vsel %vm109, %v479, 0.0
    %v483 = vsel %vm110, %v478, 0.0
    %v484 = vsel %vm111, %v477, 0.0
    %v485 = vrot.slane %v469, 1
    %v486 = vrot.slane %v470, 1
    %v487 = vrot.slane %v471, 1
    %v488 = vrot.slane %v472, 1
    %v489 = vsel %vm120, %v487, %v488
    %v490 = vsel %vm120, %v486, %v487
    %v491 = vsel %vm120, %v485, %v486
    %v492 = vsel %vm120, %v488, %v485
    %v493 = vsel %vm129, %v491, 0.0
    %v494 = vsel %vm130, %v490, 0.0
    %v495 = vsel %vm131, %v489, 0.0
    %v496 = vsel %vm132, %v492, 0.0
    %v497 = vpack.c.bf16 %v482, %v481
    %v498 = vpack.c.bf16 %v470, %v469
    %v499 = vpack.c.bf16 %v494, %v493
    %v500 = vpack.c.bf16 %v484, %v483
    %v501 = vpack.c.bf16 %v472, %v471
    %v502 = vpack.c.bf16 %v496, %v495
    %v503 = vld [vmem:[#allocation7] sm:$0xf]
    %v504 = vld [vmem:[#allocation7 + $0x4] sm:$0xf]
    %v505 = vld [vmem:[#allocation7 + $0x8] sm:$0xf]
    %v506 = vld [vmem:[#allocation7 + $0xc] sm:$0xf]
    %v507 = vld [vmem:[#allocation7 + $0x10] sm:$0xf]
    %v508 = vld [vmem:[#allocation7 + $0x14] sm:$0xf]
    %v509 = vld [vmem:[#allocation7 + $0x18] sm:$0xf]
    %v510 = vld [vmem:[#allocation7 + $0x1c] sm:$0xf]
    %v511 = vld [vmem:[#allocation7 + $0x20] sm:$0xf]
    %v512 = vld [vmem:[#allocation7 + $0x24] sm:$0xf]
    %v513 = vld [vmem:[#allocation7 + $0x28] sm:$0xf]
    %v514 = vld [vmem:[#allocation7 + $0x2c] sm:$0xf]
    %v515 = vld [vmem:[#allocation7 + $0x30] sm:$0xf]
    %v516 = vld [vmem:[#allocation7 + $0x34] sm:$0xf]
    %v517 = vld [vmem:[#allocation7 + $0x38] sm:$0xf]
    %v518 = vld [vmem:[#allocation7 + $0x3c] sm:$0xf]
    %v519 = vld [vmem:[#allocation7 + $0x40] sm:$0xf]
    %v520 = vld [vmem:[#allocation7 + $0x44] sm:$0xf]
    %v521 = vld [vmem:[#allocation7 + $0x48] sm:$0xf]
    %v522 = vld [vmem:[#allocation7 + $0x4c] sm:$0xf]
    %v523 = vld [vmem:[#allocation7 + $0x50] sm:$0xf]
    %v524 = vld [vmem:[#allocation7 + $0x54] sm:$0xf]
    %v525 = vld [vmem:[#allocation7 + $0x58] sm:$0xf]
    %v526 = vld [vmem:[#allocation7 + $0x5c] sm:$0xf]
    %v527 = vld [vmem:[#allocation7 + $0x60] sm:$0xf]
    %v528 = vld [vmem:[#allocation7 + $0x64] sm:$0xf]
    %v529 = vld [vmem:[#allocation7 + $0x68] sm:$0xf]
    %v530 = vld [vmem:[#allocation7 + $0x6c] sm:$0xf]
    %v531 = vld [vmem:[#allocation7 + $0x70] sm:$0xf]
    %v532 = vld [vmem:[#allocation7 + $0x74] sm:$0xf]
    %v533 = vld [vmem:[#allocation7 + $0x78] sm:$0xf]
    %v534 = vld [vmem:[#allocation7 + $0x7c] sm:$0xf]
    %v535 = vld [vmem:[#allocation7 + $0x80] sm:$0xf]
    %v536 = vld [vmem:[#allocation7 + $0x84] sm:$0xf]
    %v537 = vld [vmem:[#allocation7 + $0x88] sm:$0xf]
    %v538 = vld [vmem:[#allocation7 + $0x8c] sm:$0xf]
    %v539 = vld [vmem:[#allocation7 + $0x90] sm:$0xf]
    %v540 = vld [vmem:[#allocation7 + $0x94] sm:$0xf]
    %v541 = vld [vmem:[#allocation7 + $0x98] sm:$0xf]
    %v542 = vld [vmem:[#allocation7 + $0x9c] sm:$0xf]
    %v543 = vld [vmem:[#allocation7 + $0xa0] sm:$0xf]
    %v544 = vld [vmem:[#allocation7 + $0xa4] sm:$0xf]
    %v545 = vld [vmem:[#allocation7 + $0xa8] sm:$0xf]
    %v546 = vld [vmem:[#allocation7 + $0xac] sm:$0xf]
    %v547 = vld [vmem:[#allocation7 + $0xb0] sm:$0xf]
    %v548 = vld [vmem:[#allocation7 + $0xb4] sm:$0xf]
    %v549 = vld [vmem:[#allocation7 + $0xb8] sm:$0xf]
    %v550 = vld [vmem:[#allocation7 + $0xbc] sm:$0xf]
    %v599 = vunpack.c.l.b16 %v503
    %v600 = vunpack.c.l.b16 %v504
    %v601 = vunpack.c.l.b16 %v505
    %v602 = vunpack.c.l.b16 %v506
    %v603 = vunpack.c.l.b16 %v507
    %v604 = vunpack.c.l.b16 %v508
    %v605 = vunpack.c.l.b16 %v509
    %v606 = vunpack.c.l.b16 %v510
    %v607 = vunpack.c.l.b16 %v511
    %v608 = vunpack.c.l.b16 %v512
    %v609 = vunpack.c.l.b16 %v513
    %v610 = vunpack.c.l.b16 %v514
    %v611 = vunpack.c.l.b16 %v515
    %v612 = vunpack.c.l.b16 %v516
    %v613 = vunpack.c.l.b16 %v517
    %v614 = vunpack.c.l.b16 %v518
    %v615 = vunpack.c.l.b16 %v519
    %v616 = vunpack.c.l.b16 %v520
    %v617 = vunpack.c.l.b16 %v521
    %v618 = vunpack.c.l.b16 %v522
    %v619 = vunpack.c.l.b16 %v523
    %v620 = vunpack.c.l.b16 %v524
    %v621 = vunpack.c.l.b16 %v525
    %v622 = vunpack.c.l.b16 %v526
    %v623 = vunpack.c.l.b16 %v527
    %v624 = vunpack.c.l.b16 %v528
    %v625 = vunpack.c.l.b16 %v529
    %v626 = vunpack.c.l.b16 %v530
    %v627 = vunpack.c.l.b16 %v531
    %v628 = vunpack.c.l.b16 %v532
    %v629 = vunpack.c.l.b16 %v533
    %v630 = vunpack.c.l.b16 %v534
    %v631 = vunpack.c.l.b16 %v535
    %v632 = vunpack.c.l.b16 %v536
    %v633 = vunpack.c.l.b16 %v537
    %v634 = vunpack.c.l.b16 %v538
    %v635 = vunpack.c.l.b16 %v539
    %v636 = vunpack.c.l.b16 %v540
    %v637 = vunpack.c.l.b16 %v541
    %v638 = vunpack.c.l.b16 %v542
    %v639 = vunpack.c.l.b16 %v543
    %v640 = vunpack.c.l.b16 %v544
    %v641 = vunpack.c.l.b16 %v545
    %v642 = vunpack.c.l.b16 %v546
    %v643 = vunpack.c.l.b16 %v547
    %v644 = vunpack.c.l.b16 %v548
    %v645 = vunpack.c.l.b16 %v549
    %v646 = vunpack.c.l.b16 %v550
    %v647 = vpack.c.b16 %v600, %v599
    %v648 = vpack.c.b16 %v602, %v601
    %v649 = vpack.c.b16 %v604, %v603
    %v650 = vpack.c.b16 %v606, %v605
    %v651 = vpack.c.b16 %v608, %v607
    %v652 = vpack.c.b16 %v610, %v609
    %v653 = vpack.c.b16 %v612, %v611
    %v654 = vpack.c.b16 %v614, %v613
    %v655 = vpack.c.b16 %v616, %v615
    %v656 = vpack.c.b16 %v618, %v617
    %v657 = vpack.c.b16 %v620, %v619
    %v658 = vpack.c.b16 %v622, %v621
    %v659 = vpack.c.b16 %v624, %v623
    %v660 = vpack.c.b16 %v626, %v625
    %v661 = vpack.c.b16 %v628, %v627
    %v662 = vpack.c.b16 %v630, %v629
    %v663 = vpack.c.b16 %v632, %v631
    %v664 = vpack.c.b16 %v634, %v633
    %v665 = vpack.c.b16 %v636, %v635
    %v666 = vpack.c.b16 %v638, %v637
    %v667 = vpack.c.b16 %v640, %v639
    %v668 = vpack.c.b16 %v642, %v641
    %v669 = vpack.c.b16 %v644, %v643
    %v670 = vpack.c.b16 %v646, %v645
    %695 = vmatpush.bf16.msra.mxu0 %v654
    %696 = vmatpush.bf16.msra.mxu0 %v653
    %697 = vmatpush.bf16.msra.mxu0 %v652
    %698 = vmatpush.bf16.msra.mxu0 %v651
    %699 = vmatpush.bf16.msra.mxu0 %v650
    %700 = vmatpush.bf16.msra.mxu0 %v649
    %701 = vmatpush.bf16.msra.mxu0 %v648
    %702 = vmatpush.bf16.msra.mxu0 %v647
    %703 = vmatmul.bf16.gmra.mxu0 %v497
    %v704 = vpop.f32.mrf.mxu0
    %v705 = vadd.f32 0.0, %v704
    %v706 = vpop.f32.mrf.mxu0
    %v707 = vadd.f32 0.0, %v706
    %708 = vmatmul.bf16.gmra.mxu0 %v500
    %v709 = vpop.f32.mrf.mxu0
    %v710 = vadd.f32 0.0, %v709
    %v711 = vpop.f32.mrf.mxu0
    %v712 = vadd.f32 0.0, %v711
    %713 = vdwg.mxu0
    %714 = vmatpush.bf16.msra.mxu0 %v662
    %715 = vmatpush.bf16.msra.mxu0 %v661
    %716 = vmatpush.bf16.msra.mxu0 %v660
    %717 = vmatpush.bf16.msra.mxu0 %v659
    %718 = vmatpush.bf16.msra.mxu0 %v658
    %719 = vmatpush.bf16.msra.mxu0 %v657
    %720 = vmatpush.bf16.msra.mxu0 %v656
    %721 = vmatpush.bf16.msra.mxu0 %v655
    %722 = vmatmul.bf16.gmra.mxu0 %v498
    %v723 = vpop.f32.mrf.mxu0
    %v724 = vadd.f32 %v705, %v723
    %v725 = vpop.f32.mrf.mxu0
    %v726 = vadd.f32 %v707, %v725
    %727 = vmatmul.bf16.gmra.mxu0 %v501
    %v728 = vpop.f32.mrf.mxu0
    %v729 = vadd.f32 %v710, %v728
    %v730 = vpop.f32.mrf.mxu0
    %v731 = vadd.f32 %v712, %v730
    %732 = vdwg.mxu0
    %733 = vmatpush.bf16.msra.mxu0 %v670
    %734 = vmatpush.bf16.msra.mxu0 %v669
    %735 = vmatpush.bf16.msra.mxu0 %v668
    %736 = vmatpush.bf16.msra.mxu0 %v667
    %737 = vmatpush.bf16.msra.mxu0 %v666
    %738 = vmatpush.bf16.msra.mxu0 %v665
    %739 = vmatpush.bf16.msra.mxu0 %v664
    %740 = vmatpush.bf16.msra.mxu0 %v663
    %741 = vmatmul.bf16.gmra.mxu0 %v499
    %v742 = vpop.f32.mrf.mxu0
    %v743 = vadd.f32 %v724, %v742
    %v744 = vpop.f32.mrf.mxu0
    %v745 = vadd.f32 %v726, %v744
    %746 = vmatmul.bf16.gmra.mxu0 %v502
    %v747 = vpop.f32.mrf.mxu0
    %v748 = vadd.f32 %v729, %v747
    %v749 = vpop.f32.mrf.mxu0
    %v750 = vadd.f32 %v731, %v749
    %751 = vdwg.mxu0
    %v752 = vld [vmem:[%s5] sm:$0x1]
    %v753 = vld [vmem:[%s6] sm:$0x1]
    %v754 = vadd.f32 %v743, %v745
    %v755 = vadd.f32 %v754, %v748
    %v756 = vadd.f32 %v755, %v750
    %v757 = vrot.slane %v756, 4
    %v758 = vadd.f32 %v756, %v757
    %v759 = vrot.slane %v758, 2
    %v760 = vadd.f32 %v758, %v759
    %v761 = vrot.slane %v760, 1
    %v762 = vadd.f32 %v760, %v761
    %v763 = vmul.f32 %v743, %v743
    %v764 = vmul.f32 %v745, %v745
    %v765 = vmul.f32 %v748, %v748
    %v766 = vmul.f32 %v750, %v750
    %v767 = vadd.f32 %v763, %v764
    %v768 = vadd.f32 %v767, %v765
    %v769 = vadd.f32 %v768, %v766
    %v770 = vrot.slane %v769, 4
    %v771 = vadd.f32 %v769, %v770
    %v772 = vrot.slane %v771, 2
    %v773 = vadd.f32 %v771, %v772
    %v774 = vrot.slane %v773, 1
    %v775 = vadd.f32 %v773, %v774
    %v776 = vsel %vm416, %v762, %v775
    %777 = vrot.lane.b32.xlu0 %v776, 8
    %v778 = vpop.permute.xlu0 %777
    %v779 = vadd.f32 %v776, %v778
    %780 = vrot.lane.b32.xlu0 %v779, 16
    %v781 = vpop.permute.xlu0 %780
    %v782 = vadd.f32 %v779, %v781
    %783 = vrot.lane.b32.xlu0 %v782, 32
    %v784 = vpop.permute.xlu0 %783
    %v785 = vadd.f32 %v782, %v784
    %786 = vrot.lane.b32.xlu0 %v785, 64
    %v787 = vpop.permute.xlu0 %786
    %v788 = vadd.f32 %v785, %v787
    %v789 = vmul.f32 %v788, 0.001953125
    %v790 = vmul.f32 %v789, %v789
    %v792 = vrot.slane %v790, 7
    %v794 = vsub.f32 %v789, %v792
    %v795 = vadd.f32 %v794, 1e-05
    %v796 = vrsqrt.pop %v795
    %v797 = vmul.f32 %v796, %v795
    %v798 = vmul.f32 %v797, %v796
    %v799 = vmul.f32 0.5, %v798
    %v800 = vsub.f32 1.5, %v799
    %v801 = vmul.f32 %v796, %v800
    %vm802 = vweird.f32 %v795
    %vm803 = vweird.f32 %v796
    %vm804 = vmor %vm802, %vm803
    %v805 = vsel %vm804, %v796, %v801
    %807 = vst [vmem:[#allocation1] sm:$0xff] %v805
    %s808 = scalar_lea.vmem [#allocation1], 1
    %v809 = vld [vmem:[%s808] ss:$9 sm:$0xff]
    %v811 = vmul.f32 %v752, %v809
    %v812 = vmul.f32 %v789, %v811
    %v813 = vsub.f32 %v753, %v812
    %v815 = vperm.slane %v811, 0
    %v817 = vmul.f32 %v743, %v815
    %v818 = vmul.f32 %v745, %v815
    %v819 = vmul.f32 %v748, %v815
    %v820 = vmul.f32 %v750, %v815
    %v822 = vperm.slane %v813, 0
    %v824 = vadd.f32 %v817, %v822
    %v825 = vadd.f32 %v818, %v822
    %v826 = vadd.f32 %v819, %v822
    %v827 = vadd.f32 %v820, %v822
    %v828 = vadd.f32 %v824, %v91
    %v829 = vadd.f32 %v825, %v92
    %v830 = vadd.f32 %v826, %v93
    %v831 = vadd.f32 %v827, %v94
    %v832 = vmax.f32 %v828, 0.0
    %v833 = vmax.f32 %v829, 0.0
    %v834 = vmax.f32 %v830, 0.0
    %v835 = vmax.f32 %v831, 0.0
    %836 = vst [vmem:[#allocation8] sm:$0xff] %v832
    %837 = vst [vmem:[#allocation8 + $0x8] sm:$0xff] %v833
    %838 = vst [vmem:[#allocation8 + $0x10] sm:$0xff] %v834
    %839 = vst [vmem:[#allocation8 + $0x18] sm:$0xff] %v835
    // Predicated region
    $region42: #{tpu_custom_call.1} parent=1 // pred_check
      _
    $region43: #{tpu_custom_call.1} parent=1 // pred_check_branch
      %841 = sbr.rel (0) target = $region45
    $region44: #{tpu_custom_call.1} parent=1 // pred_region
      %843 = vsyncadd [#allocation4], 0
      %s844 = sshll.u32 [#allocation8], 4
      %s845 = int_to_ptr.vmem [resolvable:$true] %s844
      %s846 = sshll.u32 %s7, 4
      %s847 = int_to_ptr.hbm [resolvable:$true] %s846
      %852 = dma.vmem_to_hbm [thread:$0]  %s845, 512, %s847, [#allocation4], 128, 128, 8
    $region45: #{tpu_custom_call.1} parent=1 // pred_fallthru
      _
    // Predicated region
    $region46: #{tpu_custom_call.1} parent=1 // pred_check
      _
    $region47: #{tpu_custom_call.1} parent=1 // pred_check_branch
      %854 = sbr.rel (0) target = $region49
    $region48: #{tpu_custom_call.1} parent=1 // pred_region
      %856 = dma.done [#allocation4], 512
    $region49: #{tpu_custom_call.1} parent=1 // pred_fallthru
      _
    %857 = vsyncpa [#allocation3], 1
    %858 = vsyncpa [#allocation6], 1
    %859 = vsyncpa [#allocation4], 1

</llo_original>
